<compile_context>
chip_gen: v7x
topology: tpu7x:2x2x1
jax: 0.10.0
libtpu: 0.0.40
codegen_flags: <defaults>
</compile_context>

<pallas_src>
import functools
import math

import jax
import jax.numpy as jnp
from jax.experimental import pallas as pl
from jax.experimental.pallas import tpu as pltpu


def _round_up(x, m):
    return ((x + m - 1) // m) * m


def _pick_tile(dim, granule, target):
    """Pick (tile, padded_dim): tile is a `granule` multiple dividing padded_dim.

    Prefers zero extra padding (largest divisor of the granule-rounded dim);
    only pads up to a `target` multiple when that costs <= ~6% extra elements.
    """
    target = max(granule, (target // granule) * granule)
    dp = _round_up(dim, granule)
    if dp <= target:
        return dp, dp                       # single block, minimal padding
    best = granule
    t = granule
    while t <= target:
        if dp % t == 0:
            best = t
        t += granule
    dp_t = _round_up(dim, target)
    if best < target and (dp_t - dp) * 16 <= dp:
        return target, dp_t
    return best, dp


def _gcn_kernel(*refs, tk, fuse_w, b_resident):
    """One (row tile, k tile) step of  o = (adj @ B) [@ W] + bias."""
    if fuse_w:
        a_ref, b_ref, w_ref, bias_ref, o_ref, acc_ref = refs
    else:
        a_ref, b_ref, bias_ref, o_ref, acc_ref = refs
        w_ref = None
    k = pl.program_id(1)

    @pl.when(k == 0)
    def _init():
        acc_ref[...] = jnp.zeros_like(acc_ref)

    if b_resident and b_ref.shape[0] != tk:
        # B is fully VMEM-resident: slice out this step's K chunk in-kernel.
        start = pl.multiple_of(k * tk, tk)
        b_blk = b_ref[pl.ds(start, tk), :]
    else:
        b_blk = b_ref[...]

    acc_ref[...] += jnp.dot(a_ref[...], b_blk,
                            preferred_element_type=jnp.float32)

    @pl.when(k == pl.num_programs(1) - 1)
    def _finalize():
        acc = acc_ref[...]
        if fuse_w:
            # Tiny fused feature matmul: free under the mem-bound loop's slack.
            acc = jnp.dot(acc, w_ref[...], preferred_element_type=jnp.float32)
        o_ref[...] = (acc + bias_ref[...]).astype(o_ref.dtype)


def _gcn_adj_matmul(adj, b_mat, weight=None, bias=None, out_dtype=None,
                    tm_target=512, tk_target=512,
                    resident_rhs_budget=20 * 1024 * 1024):
    """o = adj @ b_mat [@ weight] + bias  as one tiled Pallas kernel.

    adj is streamed in (tm, tk) tiles with an f32 VMEM accumulator (reduction
    axis last); b_mat (and weight / bias, if given) are kept VMEM resident.
    Feature dims are zero-padded to 128 multiples (lane dense) and sliced back.
    """
    N, K = adj.shape
    Kb, width = b_mat.shape
    assert K == Kb, (adj.shape, b_mat.shape)
    out_dtype = adj.dtype if out_dtype is None else out_dtype

    fuse_w = weight is not None
    if fuse_w:
        w_in, out_f = weight.shape
        assert w_in == width, (weight.shape, b_mat.shape)
    else:
        out_f = width

    adj_itemsize = jnp.dtype(adj.dtype).itemsize
    b_itemsize = jnp.dtype(b_mat.dtype).itemsize
    out_itemsize = jnp.dtype(out_dtype).itemsize
    m_granule = 8 if adj_itemsize >= 4 else 16   # sub-32-bit packs (16, 128)

    tm, Mp = _pick_tile(N, m_granule, tm_target)
    tk, Kp = _pick_tile(K, 128, tk_target)
    width_p = _round_up(width, 128)
    out_p = _round_up(out_f, 128)
    n_i, n_k = Mp // tm, Kp // tk

    adj_p = adj if (Mp, Kp) == (N, K) else jnp.pad(
        adj, ((0, Mp - N), (0, Kp - K)))
    b_p = b_mat if (Kp, width_p) == (Kb, width) else jnp.pad(
        b_mat, ((0, Kp - Kb), (0, width_p - width)))

    if bias is None:
        bias_p = jnp.zeros((1, out_p), jnp.float32)
    else:
        bias_p = jnp.pad(bias.astype(jnp.float32).reshape(1, out_f),
                         ((0, 0), (0, out_p - out_f)))

    # Keep the narrow RHS fully resident (fetched once) unless it is too big.
    b_resident = 2 * Kp * width_p * b_itemsize <= resident_rhs_budget

    # adj stream: 3-deep pipelining once there is an actual stream to hide.
    adj_bufs = 3 if n_i * n_k >= 3 else 2
    adj_idx = lambda i, k: (i, k)
    if adj_bufs > 2:
        try:
            adj_spec = pl.BlockSpec((tm, tk), adj_idx,
                                    pipeline_mode=pl.Buffered(adj_bufs))
        except (TypeError, AttributeError):  # older pallas: default 2-deep
            adj_bufs = 2
            adj_spec = pl.BlockSpec((tm, tk), adj_idx)
    else:
        adj_spec = pl.BlockSpec((tm, tk), adj_idx)

    operands = [adj_p, b_p]
    in_specs = [adj_spec]
    if b_resident:
        in_specs.append(pl.BlockSpec((Kp, width_p), lambda i, k: (0, 0)))
    else:
        in_specs.append(pl.BlockSpec((tk, width_p), lambda i, k: (k, 0)))

    if fuse_w:
        w_p = jnp.pad(weight.astype(jnp.float32),
                      ((0, width_p - w_in), (0, out_p - out_f)))
        operands.append(w_p)
        in_specs.append(pl.BlockSpec((width_p, out_p), lambda i, k: (0, 0)))

    operands.append(bias_p)
    in_specs.append(pl.BlockSpec((1, out_p), lambda i, k: (0, 0)))

    kernel = functools.partial(_gcn_kernel, tk=tk, fuse_w=fuse_w,
                               b_resident=b_resident)

    # VMEM budget (double-buffered unless noted) -> scoped vmem limit.
    needed = (adj_bufs * tm * tk * adj_itemsize
              + 2 * (Kp if b_resident else tk) * width_p * b_itemsize
              + (2 * width_p * out_p * 4 if fuse_w else 0)
              + 2 * out_p * 4
              + tm * width_p * 4               # f32 accumulator scratch
              + 2 * tm * out_p * out_itemsize)
    # Stay within v7x's 64 MiB/TC when possible (cap ~48 MB), but never below
    # what the tiling actually needs.
    vmem_limit = int(min(max(needed + (4 << 20), 16 << 20), 48 << 20))
    if needed + (2 << 20) > vmem_limit:
        vmem_limit = int(needed + (2 << 20))

    out = pl.pallas_call(
        kernel,
        out_shape=jax.ShapeDtypeStruct((Mp, out_p), out_dtype),
        grid_spec=pltpu.PrefetchScalarGridSpec(
            num_scalar_prefetch=0,
            grid=(n_i, n_k),
            in_specs=in_specs,
            out_specs=pl.BlockSpec((tm, out_p), lambda i, k: (i, 0)),
            scratch_shapes=[pltpu.VMEM((tm, width_p), jnp.float32)],
        ),
        compiler_params=pltpu.CompilerParams(
            dimension_semantics=("parallel", "arbitrary"),
            vmem_limit_bytes=vmem_limit,
        ),
    )(*operands)

    if (Mp, out_p) != (N, out_f):
        out = out[:N, :out_f]
    return out


def graph_neural_node(x, adj, weight, bias=None, compute_dtype=None,
                      bf16_threshold=4096):
    """output = adj @ (x @ weight) + bias, association-chosen and fused."""
    N, in_f = x.shape
    w_in, out_f = weight.shape
    assert w_in == in_f, (x.shape, weight.shape)
    out_dtype = x.dtype

    if compute_dtype is None and N >= bf16_threshold:
        # HBM-bound on the N x N adj stream: bf16 operands halve it (f32
        # accumulation kept).  Loosens tolerances vs an f32 reference.
        compute_dtype = jnp.bfloat16

    adj_c = adj if compute_dtype is None else adj.astype(compute_dtype)

    if in_f <= out_f:
        # Fused single kernel: o = (adj @ x) @ W + b; the intermediate has
        # width min(in, out) and never leaves VMEM (W applied in finalize).
        x_c = x if compute_dtype is None else x.astype(compute_dtype)
        return _gcn_adj_matmul(adj_c, x_c, weight=weight, bias=bias,
                               out_dtype=out_dtype)

    # in > out: the (N,in)@(in,out) matmul is tiny -- let XLA do it, then one
    # Pallas kernel for o = adj @ t + b with t fully VMEM resident.
    t = jnp.dot(x, weight, preferred_element_type=jnp.float32)
    t = t.astype(x.dtype if compute_dtype is None else compute_dtype)
    return _gcn_adj_matmul(adj_c, t, weight=None, bias=bias,
                           out_dtype=out_dtype)


def _reference(x, adj, weight, bias):
    return adj @ (x @ weight) + bias[None, :]


def _make_inputs(key, n, in_features, out_features):
    kx, kadj, kw, kb = jax.random.split(key, 4)
    x = jax.random.normal(kx, (n, in_features), dtype=jnp.float32)
    adj = jax.random.uniform(kadj, (n, n), dtype=jnp.float32)
    # reset_parameters(): uniform(-stdv, stdv) with stdv = 1/sqrt(out_features)
    stdv = 1.0 / math.sqrt(out_features)
    weight = jax.random.uniform(
        kw, (in_features, out_features), minval=-stdv, maxval=stdv,
        dtype=jnp.float32)
    bias = jax.random.uniform(
        kb, (out_features,), minval=-stdv, maxval=stdv, dtype=jnp.float32)
    return x, adj, weight, bias


if __name__ == "__main__":
    key = jax.random.PRNGKey(0)
    k1, k2, k3 = jax.random.split(key, 3)

    # Case 1: small module-like shapes; in <= out -> fully fused single kernel.
    x, adj, w, b = _make_inputs(k1, n=8, in_features=16, out_features=32)
    out = jax.block_until_ready(graph_neural_node(x, adj, w, b))
    ref = _reference(x, adj, w, b)
    assert out.shape == ref.shape
    assert jnp.allclose(out, ref, atol=1e-5, rtol=1e-5), "mismatch (small case)"

    # Case 2: in > out branch (XLA x@W + Pallas adj matmul), unpadded 384 tile.
    x2, adj2, w2, b2 = _make_inputs(k2, n=384, in_features=96, out_features=40)
    out2 = jax.block_until_ready(graph_neural_node(x2, adj2, w2, b2))
    ref2 = _reference(x2, adj2, w2, b2)
    assert out2.shape == ref2.shape
    assert jnp.allclose(out2, ref2, atol=1e-3, rtol=1e-4), "mismatch (384 case)"

    # Case 3: multi-step reduction grid (2x2 grid of 512 tiles), resident-B
    # in-kernel K slicing and 3-deep adj pipelining, fused W finalize.
    x3, adj3, w3, b3 = _make_inputs(k3, n=1024, in_features=64, out_features=96)
    out3 = jax.block_until_ready(graph_neural_node(x3, adj3, w3, b3))
    ref3 = _reference(x3, adj3, w3, b3)
    assert out3.shape == ref3.shape
    assert jnp.allclose(out3, ref3, atol=1e-3, rtol=1e-4), "mismatch (1024 case)"

    print("KERNEL_OK")
</pallas_src>

<mosaic_0001>
module attributes {stable_mosaic.version = 11 : i64} {
  func.func @_gcn_kernel(%arg0: i32, %arg1: i32, %arg2: memref<8x128xf32, #tpu.memory_space<vmem>>, %arg3: memref<128x128xf32, #tpu.memory_space<vmem>>, %arg4: memref<128x128xf32, #tpu.memory_space<vmem>>, %arg5: memref<1x128xf32, #tpu.memory_space<vmem>>, %arg6: memref<8x128xf32, #tpu.memory_space<vmem>>, %arg7: memref<8x128xf32, #tpu.memory_space<vmem>>) attributes {dimension_semantics = [#tpu.dimension_semantics<parallel>, #tpu.dimension_semantics<arbitrary>], iteration_bounds = array<i64: 1, 1>, scalar_prefetch = 0 : i64, scratch_operands = 1 : i64, tpu.core_type = #tpu.core_type<tc>, window_params = [{transform_indices = @transform_0, window_bounds = array<i64: 8, 128>}, {pipeline_mode = #tpu.pipeline_mode<synchronous>, transform_indices = @transform_1, window_bounds = array<i64: 128, 128>}, {pipeline_mode = #tpu.pipeline_mode<synchronous>, transform_indices = @transform_2, window_bounds = array<i64: 128, 128>}, {pipeline_mode = #tpu.pipeline_mode<synchronous>, transform_indices = @transform_3, window_bounds = array<i64: 1, 128>}, {transform_indices = @transform_4, window_bounds = array<i64: 8, 128>}]} {
    %c0_i32 = arith.constant 0 : i32
    %0 = arith.cmpi eq, %arg1, %c0_i32 : i32
    %1 = arith.extui %0 : i1 to i32
    %c0_i32_0 = arith.constant 0 : i32
    %2 = arith.cmpi ne, %1, %c0_i32_0 : i32
    scf.if %2 {
      %cst_10 = arith.constant 0.000000e+00 : f32
      %12 = vector.broadcast %cst_10 : f32 to vector<8x128xf32>
      %c0_11 = arith.constant 0 : index
      %c0_12 = arith.constant 0 : index
      %13 = vector.load %arg7[%c0_11, %c0_12] : memref<8x128xf32, #tpu.memory_space<vmem>>, vector<8x128xf32>
      tpu.vector_store %arg7[%c0_11, %c0_12], %12 {strides = array<i32>} : memref<8x128xf32, #tpu.memory_space<vmem>>, vector<8x128xf32>,
    } else {
    }
    %c0 = arith.constant 0 : index
    %c0_1 = arith.constant 0 : index
    %3 = vector.load %arg3[%c0, %c0_1] : memref<128x128xf32, #tpu.memory_space<vmem>>, vector<128x128xf32>
    %c0_2 = arith.constant 0 : index
    %c0_3 = arith.constant 0 : index
    %4 = vector.load %arg7[%c0_2, %c0_3] : memref<8x128xf32, #tpu.memory_space<vmem>>, vector<8x128xf32>
    %c0_4 = arith.constant 0 : index
    %c0_5 = arith.constant 0 : index
    %5 = vector.load %arg2[%c0_4, %c0_5] : memref<8x128xf32, #tpu.memory_space<vmem>>, vector<8x128xf32>
    %cst = arith.constant dense<0.000000e+00> : vector<8x128xf32>
    %6 = tpu.matmul %5, %3, %cst {dimension_numbers = #tpu.dot_dimension_numbers<[1], [0], [0], [1], [0, 0, 1, 1], [], []>} : vector<8x128xf32>, vector<128x128xf32>, vector<8x128xf32> -> vector<8x128xf32>
    %7 = arith.addf %4, %6 : vector<8x128xf32>
    %c0_6 = arith.constant 0 : index
    %c0_7 = arith.constant 0 : index
    %8 = vector.load %arg7[%c0_6, %c0_7] : memref<8x128xf32, #tpu.memory_space<vmem>>, vector<8x128xf32>
    tpu.vector_store %arg7[%c0_6, %c0_7], %7 {strides = array<i32>} : memref<8x128xf32, #tpu.memory_space<vmem>>, vector<8x128xf32>,
    %c0_i32_8 = arith.constant 0 : i32
    %9 = arith.cmpi eq, %arg1, %c0_i32_8 : i32
    %10 = arith.extui %9 : i1 to i32
    %c0_i32_9 = arith.constant 0 : i32
    %11 = arith.cmpi ne, %10, %c0_i32_9 : i32
    scf.if %11 {
      %c0_10 = arith.constant 0 : index
      %c0_11 = arith.constant 0 : index
      %12 = vector.load %arg7[%c0_10, %c0_11] : memref<8x128xf32, #tpu.memory_space<vmem>>, vector<8x128xf32>
      %c0_12 = arith.constant 0 : index
      %c0_13 = arith.constant 0 : index
      %13 = vector.load %arg4[%c0_12, %c0_13] : memref<128x128xf32, #tpu.memory_space<vmem>>, vector<128x128xf32>
      %cst_14 = arith.constant dense<0.000000e+00> : vector<8x128xf32>
      %14 = tpu.matmul %12, %13, %cst_14 {dimension_numbers = #tpu.dot_dimension_numbers<[1], [0], [0], [1], [0, 0, 1, 1], [], []>} : vector<8x128xf32>, vector<128x128xf32>, vector<8x128xf32> -> vector<8x128xf32>
      %c0_15 = arith.constant 0 : index
      %c0_16 = arith.constant 0 : index
      %15 = vector.load %arg5[%c0_15, %c0_16] : memref<1x128xf32, #tpu.memory_space<vmem>>, vector<1x128xf32>
      %16 = vector.broadcast %15 : vector<1x128xf32> to vector<8x128xf32>
      %17 = arith.addf %14, %16 : vector<8x128xf32>
      %c0_17 = arith.constant 0 : index
      %c0_18 = arith.constant 0 : index
      %18 = vector.load %arg6[%c0_17, %c0_18] : memref<8x128xf32, #tpu.memory_space<vmem>>, vector<8x128xf32>
      tpu.vector_store %arg6[%c0_17, %c0_18], %17 {strides = array<i32>} : memref<8x128xf32, #tpu.memory_space<vmem>>, vector<8x128xf32>,
    } else {
    }
    return
  }
  func.func @transform_0(%arg0: i32, %arg1: i32) -> (i32, i32) {
    %c0_i32 = arith.constant 0 : i32
    return %arg0, %arg1 : i32, i32
  }
  func.func @transform_1(%arg0: i32, %arg1: i32) -> (i32, i32) {
    %c0_i32 = arith.constant 0 : i32
    %c0_i32_0 = arith.constant 0 : i32
    %c0_i32_1 = arith.constant 0 : i32
    return %c0_i32, %c0_i32_0 : i32, i32
  }
  func.func @transform_2(%arg0: i32, %arg1: i32) -> (i32, i32) {
    %c0_i32 = arith.constant 0 : i32
    %c0_i32_0 = arith.constant 0 : i32
    %c0_i32_1 = arith.constant 0 : i32
    return %c0_i32, %c0_i32_0 : i32, i32
  }
  func.func @transform_3(%arg0: i32, %arg1: i32) -> (i32, i32) {
    %c0_i32 = arith.constant 0 : i32
    %c0_i32_0 = arith.constant 0 : i32
    %c0_i32_1 = arith.constant 0 : i32
    return %c0_i32, %c0_i32_0 : i32, i32
  }
  func.func @transform_4(%arg0: i32, %arg1: i32) -> (i32, i32) {
    %c0_i32 = arith.constant 0 : i32
    %c0_i32_0 = arith.constant 0 : i32
    return %arg0, %c0_i32 : i32, i32
  }
}

</mosaic_0001>

<llo_original>
// kernel: tpu_custom_call.1
$region0: #{tpu_custom_call.1}
  #allocation0 [shape = 'u32[]', space=smem, size = 0x4, offset = 0x4, fixed_abs, tag = 'smem constant byte address 0x4 - core index']
  #allocation1 [shape = 'u32[144,128]{1,0:T(1,128)}', space=vmem, size = 0x12000, scoped, tag = 'internal scratch']
  #allocation2 [shape = 'f32[8,128]{1,0:T(8,128)}', space=vmem, size = 0x1000, scoped, tag = 'scratch operand']
  %s0 = inlined_call_operand.hbm [shape: f32[8,128], index: 0, kind: input, shape index: {}]
  %s1 = inlined_call_operand.hbm [shape: f32[128,128], index: 1, kind: input, shape index: {}]
  %s2 = inlined_call_operand.hbm [shape: f32[128,128], index: 2, kind: input, shape index: {}]
  %s3 = inlined_call_operand.vmem [shape: f32[1,128], index: 3, kind: input, shape index: {}]
  %s4 = inlined_call_operand.hbm [shape: f32[8,128], index: 4, kind: output, shape index: {}]
  %s5 = sld [smem:[#allocation0]]
  $region46: #{tpu_custom_call.1} parent=0
    _
  %s7 = ssub.s32 1, %s5
  %s8 = scalar_select 0, %s7, %s5
  $region1: #{tpu_custom_call.1} parent=0
    #allocation3 [shape = 'u8[4096]{0}', space=vmem, size = 0x1000, scoped, tag = 'input window, operand 0, single buffered']
    #allocation4 [shape = 's32[1]{0}', space=sflag, size = 0x4, scoped, tag = 'scoped memory for tpu_custom_call.1']
    #allocation5 [shape = 's32[1]{0}', space=sflag, size = 0x4, scoped, tag = 'scoped memory for tpu_custom_call.1']
    #allocation6 [shape = 'u8[65536]{0}', space=vmem, size = 0x10000, scoped, tag = 'input window, operand 1, single buffered']
    #allocation7 [shape = 's32[1]{0}', space=sflag, size = 0x4, scoped, tag = 'scoped memory for tpu_custom_call.1']
    #allocation8 [shape = 'u8[65536]{0}', space=vmem, size = 0x10000, scoped, tag = 'input window, operand 2, single buffered']
    #allocation9 [shape = 'u8[4096]{0}', space=vmem, size = 0x1000, scoped, tag = 'output window, operand 0, single buffered']
    %9 = vsyncpa [#allocation4], 0
    %10 = vsyncpa [#allocation7], 0
    %11 = vsyncpa [#allocation5], 0
    // Predicated region
    $region2: #{tpu_custom_call.1} parent=1 // pred_check
      _
    $region3: #{tpu_custom_call.1} parent=1 // pred_check_branch
      %13 = sbr.rel (0) target = $region5
    $region4: #{tpu_custom_call.1} parent=1 // pred_region
      %s15 = ssub.s32 128, 128
      %16 = vsyncadd [#allocation4], %s15
      %s18 = sshll.u32 [#allocation3], 4
      %s19 = int_to_ptr.vmem [resolvable:$true] %s18
      %21 = dma.hbm_to_vmem [thread:$0]  %s0, 128, %s19, [#allocation4]
    $region5: #{tpu_custom_call.1} parent=1 // pred_fallthru
      _
    // Predicated region
    $region6: #{tpu_custom_call.1} parent=1 // pred_check
      _
    $region7: #{tpu_custom_call.1} parent=1 // pred_check_branch
      %23 = sbr.rel (0) target = $region9
    $region8: #{tpu_custom_call.1} parent=1 // pred_region
      %s25 = ssub.s32 2048, 2048
      %26 = vsyncadd [#allocation7], %s25
      %s27 = sshll.u32 [#allocation6], 4
      %s28 = int_to_ptr.vmem [resolvable:$true] %s27
      %33 = dma.hbm_to_vmem [thread:$0]  %s1, 2048, %s28, [#allocation7], 128, 128, 8
    $region9: #{tpu_custom_call.1} parent=1 // pred_fallthru
      _
    // Predicated region
    $region10: #{tpu_custom_call.1} parent=1 // pred_check
      _
    $region11: #{tpu_custom_call.1} parent=1 // pred_check_branch
      %35 = sbr.rel (0) target = $region13
    $region12: #{tpu_custom_call.1} parent=1 // pred_region
      %s37 = ssub.s32 2048, 2048
      %38 = vsyncadd [#allocation7], %s37
      %s39 = sshll.u32 [#allocation8], 4
      %s40 = int_to_ptr.vmem [resolvable:$true] %s39
      %45 = dma.hbm_to_vmem [thread:$0]  %s2, 2048, %s40, [#allocation7], 128, 128, 8
    $region13: #{tpu_custom_call.1} parent=1 // pred_fallthru
      _
    // Predicated region
    $region14: #{tpu_custom_call.1} parent=1 // pred_check
      _
    $region15: #{tpu_custom_call.1} parent=1 // pred_check_branch
      %47 = sbr.rel (0) target = $region17
    $region16: #{tpu_custom_call.1} parent=1 // pred_region
      _
    $region17: #{tpu_custom_call.1} parent=1 // pred_fallthru
      _
    // Predicated region
    $region18: #{tpu_custom_call.1} parent=1 // pred_check
      _
    $region19: #{tpu_custom_call.1} parent=1 // pred_check_branch
      %49 = sbr.rel (0) target = $region21
    $region20: #{tpu_custom_call.1} parent=1 // pred_region
      %50 = dma.done [#allocation4], 128
    $region21: #{tpu_custom_call.1} parent=1 // pred_fallthru
      _
    // Predicated region
    $region22: #{tpu_custom_call.1} parent=1 // pred_check
      _
    $region23: #{tpu_custom_call.1} parent=1 // pred_check_branch
      %52 = sbr.rel (0) target = $region25
    $region24: #{tpu_custom_call.1} parent=1 // pred_region
      %53 = dma.done [#allocation7], 2048
    $region25: #{tpu_custom_call.1} parent=1 // pred_fallthru
      _
    // Predicated region
    $region26: #{tpu_custom_call.1} parent=1 // pred_check
      _
    $region27: #{tpu_custom_call.1} parent=1 // pred_check_branch
      %55 = sbr.rel (0) target = $region29
    $region28: #{tpu_custom_call.1} parent=1 // pred_region
      %56 = dma.done [#allocation7], 2048
    $region29: #{tpu_custom_call.1} parent=1 // pred_fallthru
      _
    %p57 = scmp.eq.s32.totalorder 0, 0
    // Predicated region
    $region30: #{tpu_custom_call.1} parent=1 // pred_check
      %p58 = pneg %p57
    $region31: #{tpu_custom_call.1} parent=1 // pred_check_branch
      %60 = sbr.rel (%p58) target = $region33
    $region32: #{tpu_custom_call.1} parent=1 // pred_region
      %61 = vst [vmem:[#allocation2] sm:$0xff] 0.0
    $region33: #{tpu_custom_call.1} parent=1 // pred_fallthru
      _
    %v62 = vld [vmem:[#allocation6] sm:$0xff]
    %v63 = vld [vmem:[#allocation6 + $0x8] sm:$0xff]
    %v64 = vld [vmem:[#allocation6 + $0x10] sm:$0xff]
    %v65 = vld [vmem:[#allocation6 + $0x18] sm:$0xff]
    %v66 = vld [vmem:[#allocation6 + $0x20] sm:$0xff]
    %v67 = vld [vmem:[#allocation6 + $0x28] sm:$0xff]
    %v68 = vld [vmem:[#allocation6 + $0x30] sm:$0xff]
    %v69 = vld [vmem:[#allocation6 + $0x38] sm:$0xff]
    %v70 = vld [vmem:[#allocation6 + $0x40] sm:$0xff]
    %v71 = vld [vmem:[#allocation6 + $0x48] sm:$0xff]
    %v72 = vld [vmem:[#allocation6 + $0x50] sm:$0xff]
    %v73 = vld [vmem:[#allocation6 + $0x58] sm:$0xff]
    %v74 = vld [vmem:[#allocation6 + $0x60] sm:$0xff]
    %v75 = vld [vmem:[#allocation6 + $0x68] sm:$0xff]
    %v76 = vld [vmem:[#allocation6 + $0x70] sm:$0xff]
    %v77 = vld [vmem:[#allocation6 + $0x78] sm:$0xff]
    %v78 = vld [vmem:[#allocation2] sm:$0xff]
    %v79 = vld [vmem:[#allocation3] sm:$0xff]
    %80 = vmatprep.subr.mxu0 0.0
    %81 = vmatpush1.msra.mxu0 %v62
    %82 = vmatprep.subr.mxu0 0.0
    %83 = vmatpush1.msra.mxu0 %v63
    %84 = vmatprep.subr.mxu0 0.0
    %85 = vmatpush1.msra.mxu0 %v64
    %86 = vmatprep.subr.mxu0 0.0
    %87 = vmatpush1.msra.mxu0 %v65
    %88 = vmatprep.subr.mxu0 0.0
    %89 = vmatpush1.msra.mxu0 %v66
    %90 = vmatprep.subr.mxu0 0.0
    %91 = vmatpush1.msra.mxu0 %v67
    %92 = vmatprep.subr.mxu0 0.0
    %93 = vmatpush1.msra.mxu0 %v68
    %94 = vmatprep.subr.mxu0 0.0
    %95 = vmatpush1.msra.mxu0 %v69
    %96 = vmatprep.subr.mxu0 0.0
    %97 = vmatpush1.msra.mxu0 %v70
    %98 = vmatprep.subr.mxu0 0.0
    %99 = vmatpush1.msra.mxu0 %v71
    %100 = vmatprep.subr.mxu0 0.0
    %101 = vmatpush1.msra.mxu0 %v72
    %102 = vmatprep.subr.mxu0 0.0
    %103 = vmatpush1.msra.mxu0 %v73
    %104 = vmatprep.subr.mxu0 0.0
    %105 = vmatpush1.msra.mxu0 %v74
    %106 = vmatprep.subr.mxu0 0.0
    %107 = vmatpush1.msra.mxu0 %v75
    %108 = vmatprep.subr.mxu0 0.0
    %109 = vmatpush1.msra.mxu0 %v76
    %110 = vmatprep.subr.mxu0 0.0
    %111 = vmatpush1.msra.mxu0 %v77
    %112 = vmatprep.subr.mxu0 0.0
    %113 = vmatpush1.msra.mxu0 0.0
    %114 = vmatprep.subr.mxu0 0.0
    %115 = vmatpush1.msra.mxu0 0.0
    %116 = vmatprep.subr.mxu0 0.0
    %117 = vmatpush1.msra.mxu0 0.0
    %118 = vmatprep.subr.mxu0 0.0
    %119 = vmatpush1.msra.mxu0 0.0
    %120 = vmatprep.subr.mxu0 0.0
    %121 = vmatpush1.msra.mxu0 0.0
    %122 = vmatprep.subr.mxu0 0.0
    %123 = vmatpush1.msra.mxu0 0.0
    %124 = vmatprep.subr.mxu0 0.0
    %125 = vmatpush1.msra.mxu0 0.0
    %126 = vmatprep.subr.mxu0 0.0
    %127 = vmatpush1.msra.mxu0 0.0
    %128 = vmatprep.subr.mxu0 0.0
    %129 = vmatpush1.msra.mxu0 0.0
    %130 = vmatprep.subr.mxu0 0.0
    %131 = vmatpush1.msra.mxu0 0.0
    %132 = vmatprep.subr.mxu0 0.0
    %133 = vmatpush1.msra.mxu0 0.0
    %134 = vmatprep.subr.mxu0 0.0
    %135 = vmatpush1.msra.mxu0 0.0
    %136 = vmatprep.subr.mxu0 0.0
    %137 = vmatpush1.msra.mxu0 0.0
    %138 = vmatprep.subr.mxu0 0.0
    %139 = vmatpush1.msra.mxu0 0.0
    %140 = vmatprep.subr.mxu0 0.0
    %141 = vmatpush1.msra.mxu0 0.0
    %142 = vmatprep.subr.mxu0 0.0
    %143 = vmatpush1.msra.mxu0 0.0
    %144 = vmatprep.mubr.f32.mxu0 0.0
    %145 = vmatmul.mubr.f32.gmra.mrb[0].mxu0 %v79
    %v146 = vpop.f32.mrb[0].mxu0
    %v147 = vadd.f32 0.0, %v146
    %v148 = vpop.f32.mrb[0].mxu0
    %149 = vdwg.mxu0
    %v150 = vadd.f32 %v78, %v147
    %151 = vst [vmem:[#allocation2] sm:$0xff] %v150
    // Predicated region
    $region34: #{tpu_custom_call.1} parent=1 // pred_check
      %p152 = pneg %p57
    $region35: #{tpu_custom_call.1} parent=1 // pred_check_branch
      %154 = sbr.rel (%p152) target = $region37
    $region36: #{tpu_custom_call.1} parent=1 // pred_region
      %v155 = vld [vmem:[#allocation2] sm:$0xff]
      %v156 = vld [vmem:[#allocation8] sm:$0xff]
      %v157 = vld [vmem:[#allocation8 + $0x8] sm:$0xff]
      %v158 = vld [vmem:[#allocation8 + $0x10] sm:$0xff]
      %v159 = vld [vmem:[#allocation8 + $0x18] sm:$0xff]
      %v160 = vld [vmem:[#allocation8 + $0x20] sm:$0xff]
      %v161 = vld [vmem:[#allocation8 + $0x28] sm:$0xff]
      %v162 = vld [vmem:[#allocation8 + $0x30] sm:$0xff]
      %v163 = vld [vmem:[#allocation8 + $0x38] sm:$0xff]
      %v164 = vld [vmem:[#allocation8 + $0x40] sm:$0xff]
      %v165 = vld [vmem:[#allocation8 + $0x48] sm:$0xff]
      %v166 = vld [vmem:[#allocation8 + $0x50] sm:$0xff]
      %v167 = vld [vmem:[#allocation8 + $0x58] sm:$0xff]
      %v168 = vld [vmem:[#allocation8 + $0x60] sm:$0xff]
      %v169 = vld [vmem:[#allocation8 + $0x68] sm:$0xff]
      %v170 = vld [vmem:[#allocation8 + $0x70] sm:$0xff]
      %v171 = vld [vmem:[#allocation8 + $0x78] sm:$0xff]
      %v172 = vld [vmem:[%s3] sm:$0x1]
      %v174 = vlaneseq
      %v175 = vshrl.u32 %v174, 7
      %v176 = vsub.s32 0, %v175
      %v177 = vrot.slane %v172, %v176
      %179 = vmatprep.subr.mxu0 0.0
      %180 = vmatpush1.msra.mxu0 %v156
      %181 = vmatprep.subr.mxu0 0.0
      %182 = vmatpush1.msra.mxu0 %v157
      %183 = vmatprep.subr.mxu0 0.0
      %184 = vmatpush1.msra.mxu0 %v158
      %185 = vmatprep.subr.mxu0 0.0
      %186 = vmatpush1.msra.mxu0 %v159
      %187 = vmatprep.subr.mxu0 0.0
      %188 = vmatpush1.msra.mxu0 %v160
      %189 = vmatprep.subr.mxu0 0.0
      %190 = vmatpush1.msra.mxu0 %v161
      %191 = vmatprep.subr.mxu0 0.0
      %192 = vmatpush1.msra.mxu0 %v162
      %193 = vmatprep.subr.mxu0 0.0
      %194 = vmatpush1.msra.mxu0 %v163
      %195 = vmatprep.subr.mxu0 0.0
      %196 = vmatpush1.msra.mxu0 %v164
      %197 = vmatprep.subr.mxu0 0.0
      %198 = vmatpush1.msra.mxu0 %v165
      %199 = vmatprep.subr.mxu0 0.0
      %200 = vmatpush1.msra.mxu0 %v166
      %201 = vmatprep.subr.mxu0 0.0
      %202 = vmatpush1.msra.mxu0 %v167
      %203 = vmatprep.subr.mxu0 0.0
      %204 = vmatpush1.msra.mxu0 %v168
      %205 = vmatprep.subr.mxu0 0.0
      %206 = vmatpush1.msra.mxu0 %v169
      %207 = vmatprep.subr.mxu0 0.0
      %208 = vmatpush1.msra.mxu0 %v170
      %209 = vmatprep.subr.mxu0 0.0
      %210 = vmatpush1.msra.mxu0 %v171
      %211 = vmatprep.subr.mxu0 0.0
      %212 = vmatpush1.msra.mxu0 0.0
      %213 = vmatprep.subr.mxu0 0.0
      %214 = vmatpush1.msra.mxu0 0.0
      %215 = vmatprep.subr.mxu0 0.0
      %216 = vmatpush1.msra.mxu0 0.0
      %217 = vmatprep.subr.mxu0 0.0
      %218 = vmatpush1.msra.mxu0 0.0
      %219 = vmatprep.subr.mxu0 0.0
      %220 = vmatpush1.msra.mxu0 0.0
      %221 = vmatprep.subr.mxu0 0.0
      %222 = vmatpush1.msra.mxu0 0.0
      %223 = vmatprep.subr.mxu0 0.0
      %224 = vmatpush1.msra.mxu0 0.0
      %225 = vmatprep.subr.mxu0 0.0
      %226 = vmatpush1.msra.mxu0 0.0
      %227 = vmatprep.subr.mxu0 0.0
      %228 = vmatpush1.msra.mxu0 0.0
      %229 = vmatprep.subr.mxu0 0.0
      %230 = vmatpush1.msra.mxu0 0.0
      %231 = vmatprep.subr.mxu0 0.0
      %232 = vmatpush1.msra.mxu0 0.0
      %233 = vmatprep.subr.mxu0 0.0
      %234 = vmatpush1.msra.mxu0 0.0
      %235 = vmatprep.subr.mxu0 0.0
      %236 = vmatpush1.msra.mxu0 0.0
      %237 = vmatprep.subr.mxu0 0.0
      %238 = vmatpush1.msra.mxu0 0.0
      %239 = vmatprep.subr.mxu0 0.0
      %240 = vmatpush1.msra.mxu0 0.0
      %241 = vmatprep.subr.mxu0 0.0
      %242 = vmatpush1.msra.mxu0 0.0
      %243 = vmatprep.mubr.f32.mxu0 0.0
      %244 = vmatmul.mubr.f32.gmra.mrb[0].mxu0 %v155
      %v245 = vpop.f32.mrb[0].mxu0
      %v246 = vadd.f32 %v177, %v245
      %v247 = vpop.f32.mrb[0].mxu0
      %248 = vdwg.mxu0
      %249 = vst [vmem:[#allocation9] sm:$0xff] %v246
    $region37: #{tpu_custom_call.1} parent=1 // pred_fallthru
      _
    // Predicated region
    $region38: #{tpu_custom_call.1} parent=1 // pred_check
      _
    $region39: #{tpu_custom_call.1} parent=1 // pred_check_branch
      %251 = sbr.rel (0) target = $region41
    $region40: #{tpu_custom_call.1} parent=1 // pred_region
      %s253 = ssub.s32 128, 128
      %254 = vsyncadd [#allocation5], %s253
      %s256 = sshll.u32 [#allocation9], 4
      %s257 = int_to_ptr.vmem [resolvable:$true] %s256
      %259 = dma.vmem_to_hbm [thread:$0]  %s257, 128, %s4, [#allocation5]
    $region41: #{tpu_custom_call.1} parent=1 // pred_fallthru
      _
    // Predicated region
    $region42: #{tpu_custom_call.1} parent=1 // pred_check
      _
    $region43: #{tpu_custom_call.1} parent=1 // pred_check_branch
      %261 = sbr.rel (0) target = $region45
    $region44: #{tpu_custom_call.1} parent=1 // pred_region
      %262 = dma.done [#allocation5], 128
    $region45: #{tpu_custom_call.1} parent=1 // pred_fallthru
      _
    %263 = vsyncpa [#allocation4], 1
    %264 = vsyncpa [#allocation7], 1
    %265 = vsyncpa [#allocation5], 1

</llo_original>
